<compile_context>
chip_gen: v7x
topology: tpu7x:2x2x1
jax: 0.10.0
libtpu: 0.0.40
codegen_flags: <defaults>
</compile_context>

<pallas_src>
import functools

import jax
import jax.numpy as jnp
from jax.experimental import pallas as pl
from jax.experimental.pallas import tpu as pltpu


IN_DIM = 44          # raw Yahtzee state features
HID = 128
DICE_DIM = 5
SCORE_DIM = 13
HEAD_PAD = 128       # fused, lane-dense head output width


def _round_up(n, m):
    return ((n + m - 1) // m) * m


def _dice_mlp_kernel(x_ref, w1_ref, wr_ref, b_ref, out_ref, *, with_dice):
    # x_ref : (tb, 44)  f32   -- batch tile of states
    # w1_ref: (44, 128) bf16  -- fc1 weight
    # wr_ref: (384,128) bf16  -- [fc2 ; fc3 ; fused heads] weight slab
    # b_ref : (8, 128)  f32   -- rows 0..3 = b1, b2, b3, b_heads (rest zero)
    b_all = b_ref[...]
    x = x_ref[...].astype(jnp.bfloat16)

    w1 = w1_ref[...]
    w2 = wr_ref[0:HID, :]
    w3 = wr_ref[HID:2 * HID, :]
    wh = wr_ref[2 * HID:3 * HID, :]

    # --- 3-layer MLP trunk: bf16 MXU matmuls, f32 accumulate, f32 bias+ReLU ---
    h = jnp.dot(x, w1, preferred_element_type=jnp.float32)
    h = jnp.maximum(h + b_all[0:1, :], 0.0).astype(jnp.bfloat16)
    h = jnp.dot(h, w2, preferred_element_type=jnp.float32)
    h = jnp.maximum(h + b_all[1:2, :], 0.0).astype(jnp.bfloat16)
    h = jnp.dot(h, w3, preferred_element_type=jnp.float32)
    h = jnp.maximum(h + b_all[2:3, :], 0.0).astype(jnp.bfloat16)

    # --- fused heads: one lane-dense (tb, 128) matmul ---
    logits = jnp.dot(h, wh, preferred_element_type=jnp.float32) + b_all[3:4, :]

    lane = jax.lax.broadcasted_iota(jnp.int32, logits.shape, 1)
    score_mask = (lane >= DICE_DIM) & (lane < DICE_DIM + SCORE_DIM)

    # softmax over the 13 score lanes only (dice / padded lanes masked out)
    masked = jnp.where(score_mask, logits, -1e30)
    m = jnp.max(masked, axis=-1, keepdims=True)
    e = jnp.exp(masked - m)
    denom = jnp.sum(e, axis=-1, keepdims=True)
    softmax_vals = e / denom          # exact: denom is (tb, 1), negligible cost

    if with_dice:
        # sigmoid(x) = 0.5 * (tanh(x/2) + 1): single EUP op, overflow-free
        dice_vals = 0.5 * (jnp.tanh(0.5 * logits) + 1.0)
        out = jnp.where(lane < DICE_DIM, dice_vals, softmax_vals)
    else:
        out = softmax_vals            # lanes outside [5, 18) are exactly 0

    out_ref[...] = out


@functools.partial(jax.jit, static_argnames=("rolls_left", "tb"))
def dice_network_forward(x, w1, w_rest, b_packed, rolls_left, tb=256):
    """x: (B, 44) batch of states or a single (44,) state. Returns (dice, score)."""
    squeeze = x.ndim == 1
    if squeeze:
        x = x[None, :]
    x = x.astype(jnp.float32)
    B = x.shape[0]

    # Batch tile: multiple of 8, never larger than needed; when possible keep
    # the grid at >= 2 steps so both v7x TensorCores get work.
    tb_eff = max(8, min(tb, _round_up(B, 8)))
    if _round_up(B, tb_eff) // tb_eff < 2 and tb_eff > 8:
        tb_eff = max(8, _round_up((tb_eff + 1) // 2, 8))
    Bp = _round_up(B, tb_eff)
    if Bp != B:
        x = jnp.pad(x, ((0, Bp - B), (0, 0)))

    with_dice = rolls_left > 0
    grid = (Bp // tb_eff,)

    out = pl.pallas_call(
        functools.partial(_dice_mlp_kernel, with_dice=with_dice),
        out_shape=jax.ShapeDtypeStruct((Bp, HEAD_PAD), jnp.float32),
        grid_spec=pltpu.PrefetchScalarGridSpec(
            num_scalar_prefetch=0,
            grid=grid,
            in_specs=[
                # batch tile marches over the grid; 44 == full last dim (legal)
                pl.BlockSpec((tb_eff, IN_DIM), lambda i: (i, 0)),
                # weights / biases: same block every step -> VMEM-resident
                pl.BlockSpec((IN_DIM, HID), lambda i: (0, 0)),
                pl.BlockSpec((3 * HID, HID), lambda i: (0, 0)),
                pl.BlockSpec((8, HID), lambda i: (0, 0)),
            ],
            out_specs=pl.BlockSpec((tb_eff, HEAD_PAD), lambda i: (i, 0)),
        ),
        compiler_params=pltpu.CompilerParams(
            dimension_semantics=("parallel",)),
    )(x, w1, w_rest, b_packed)

    score = out[:B, DICE_DIM:DICE_DIM + SCORE_DIM]
    dice = out[:B, :DICE_DIM] if with_dice else None
    if squeeze:
        score = score[0]
        dice = None if dice is None else dice[0]
    # Python-level branch mirrors `if rolls_left > 0:` in the torch module.
    return dice, score


def init_params(key):
    """Synthetic params with nn.Linear shapes; torch (out,in) kept as (in,out)."""
    ks = jax.random.split(key, 10)

    def lin(kw, kb, fan_in, fan_out):
        bound = 1.0 / jnp.sqrt(float(fan_in))
        w = jax.random.uniform(kw, (fan_in, fan_out), jnp.float32, -bound, bound)
        b = jax.random.uniform(kb, (fan_out,), jnp.float32, -bound, bound)
        return w, b

    w1, b1 = lin(ks[0], ks[1], IN_DIM, HID)
    w2, b2 = lin(ks[2], ks[3], HID, HID)
    w3, b3 = lin(ks[4], ks[5], HID, HID)
    wd, bd = lin(ks[6], ks[7], HID, DICE_DIM)
    ws, bs = lin(ks[8], ks[9], HID, SCORE_DIM)

    raw = dict(w1=w1, b1=b1, w2=w2, b2=b2, w3=w3, b3=b3,
               wd=wd, bd=bd, ws=ws, bs=bs)

    # --- pack for the kernel (weights in bf16, biases in f32) ---
    wh = (jnp.zeros((HID, HEAD_PAD), jnp.float32)
          .at[:, :DICE_DIM].set(wd)
          .at[:, DICE_DIM:DICE_DIM + SCORE_DIM].set(ws))
    w1_k = w1.astype(jnp.bfloat16)                               # (44, 128)
    w_rest = jnp.concatenate([w2, w3, wh], axis=0).astype(jnp.bfloat16)  # (384,128)

    bh = (jnp.zeros((HEAD_PAD,), jnp.float32)
          .at[:DICE_DIM].set(bd)
          .at[DICE_DIM:DICE_DIM + SCORE_DIM].set(bs))
    b_packed = (jnp.zeros((8, HID), jnp.float32)
                .at[0].set(b1).at[1].set(b2).at[2].set(b3).at[3].set(bh))

    return dict(w1=w1_k, w_rest=w_rest, b_packed=b_packed, raw=raw)


def _reference(x, raw):
    """Pure-JAX reference using bf16-rounded weights (what the kernel sees)."""
    def q(w):
        return w.astype(jnp.bfloat16).astype(jnp.float32)
    h = jnp.maximum(x @ q(raw["w1"]) + raw["b1"], 0.0)
    h = jnp.maximum(h @ q(raw["w2"]) + raw["b2"], 0.0)
    h = jnp.maximum(h @ q(raw["w3"]) + raw["b3"], 0.0)
    dice = jax.nn.sigmoid(h @ q(raw["wd"]) + raw["bd"])
    score = jax.nn.softmax(h @ q(raw["ws"]) + raw["bs"], axis=-1)
    return dice, score


if __name__ == "__main__":
    key = jax.random.PRNGKey(0)
    k_param, k_x = jax.random.split(key)

    params = init_params(k_param)
    B = 16
    x = jax.random.uniform(k_x, (B, IN_DIM), jnp.float32)

    # rolls_left > 0: both heads produced.
    dice, score = dice_network_forward(
        x, params["w1"], params["w_rest"], params["b_packed"], rolls_left=2)
    jax.block_until_ready(score)
    assert dice.shape == (B, DICE_DIM) and score.shape == (B, SCORE_DIM)

    # rolls_left == 0: dice head omitted entirely (separate compiled variant).
    dice_none, score0 = dice_network_forward(
        x, params["w1"], params["w_rest"], params["b_packed"], rolls_left=0)
    jax.block_until_ready(score0)
    assert dice_none is None

    # single-state path, mirroring the torch module's 1-D usage.
    d1, s1 = dice_network_forward(
        x[0], params["w1"], params["w_rest"], params["b_packed"], rolls_left=1)
    jax.block_until_ready(s1)
    assert d1.shape == (DICE_DIM,) and s1.shape == (SCORE_DIM,)

    # Numerical sanity check vs. pure-JAX reference (tolerance covers bf16
    # activation casts inside the kernel + MXU rounding).
    ref_dice, ref_score = _reference(x, params["raw"])
    assert jnp.allclose(dice, ref_dice, atol=1e-2, rtol=1e-2)
    assert jnp.allclose(score, ref_score, atol=1e-2, rtol=1e-2)
    assert jnp.allclose(score0, ref_score, atol=1e-2, rtol=1e-2)
    assert jnp.allclose(d1, ref_dice[0], atol=1e-2, rtol=1e-2)
    assert jnp.allclose(s1, ref_score[0], atol=1e-2, rtol=1e-2)
    assert jnp.allclose(jnp.sum(score, axis=-1), 1.0, atol=1e-4)

    print("KERNEL_OK")
</pallas_src>

<mosaic_0001>
module attributes {stable_mosaic.version = 11 : i64} {
  func.func @_dice_mlp_kernel(%arg0: i32, %arg1: memref<8x44xf32, #tpu.memory_space<vmem>>, %arg2: memref<44x128xbf16, #tpu.memory_space<vmem>>, %arg3: memref<384x128xbf16, #tpu.memory_space<vmem>>, %arg4: memref<8x128xf32, #tpu.memory_space<vmem>>, %arg5: memref<8x128xf32, #tpu.memory_space<vmem>>) attributes {dimension_semantics = [#tpu.dimension_semantics<parallel>], iteration_bounds = array<i64: 2>, scalar_prefetch = 0 : i64, scratch_operands = 0 : i64, tpu.core_type = #tpu.core_type<tc>, window_params = [{transform_indices = @transform_0, window_bounds = array<i64: 8, 44>}, {pipeline_mode = #tpu.pipeline_mode<synchronous>, transform_indices = @transform_1, window_bounds = array<i64: 44, 128>}, {pipeline_mode = #tpu.pipeline_mode<synchronous>, transform_indices = @transform_2, window_bounds = array<i64: 384, 128>}, {pipeline_mode = #tpu.pipeline_mode<synchronous>, transform_indices = @transform_3, window_bounds = array<i64: 8, 128>}, {transform_indices = @transform_4, window_bounds = array<i64: 8, 128>}]} {
    %c0 = arith.constant 0 : index
    %c0_0 = arith.constant 0 : index
    %0 = vector.load %arg4[%c0, %c0_0] : memref<8x128xf32, #tpu.memory_space<vmem>>, vector<8x128xf32>
    %c0_1 = arith.constant 0 : index
    %c0_2 = arith.constant 0 : index
    %1 = vector.load %arg1[%c0_1, %c0_2] : memref<8x44xf32, #tpu.memory_space<vmem>>, vector<8x44xf32>
    %2 = arith.truncf %1 : vector<8x44xf32> to vector<8x44xbf16>
    %c0_3 = arith.constant 0 : index
    %c0_4 = arith.constant 0 : index
    %3 = vector.load %arg2[%c0_3, %c0_4] : memref<44x128xbf16, #tpu.memory_space<vmem>>, vector<44x128xbf16>
    %c0_5 = arith.constant 0 : index
    %c0_6 = arith.constant 0 : index
    %4 = vector.load %arg3[%c0_5, %c0_6] : memref<384x128xbf16, #tpu.memory_space<vmem>>, vector<128x128xbf16>
    %c128 = arith.constant 128 : index
    %c0_7 = arith.constant 0 : index
    %5 = vector.load %arg3[%c128, %c0_7] : memref<384x128xbf16, #tpu.memory_space<vmem>>, vector<128x128xbf16>
    %c256 = arith.constant 256 : index
    %c0_8 = arith.constant 0 : index
    %6 = vector.load %arg3[%c256, %c0_8] : memref<384x128xbf16, #tpu.memory_space<vmem>>, vector<128x128xbf16>
    %cst = arith.constant dense<0.000000e+00> : vector<8x128xf32>
    %7 = tpu.matmul %2, %3, %cst {dimension_numbers = #tpu.dot_dimension_numbers<[1], [0], [0], [1], [0, 0, 1, 1], [], []>} : vector<8x44xbf16>, vector<44x128xbf16>, vector<8x128xf32> -> vector<8x128xf32>
    %8 = vector.extract_strided_slice %0 {offsets = [0, 0], sizes = [1, 128], strides = [1, 1]} : vector<8x128xf32> to vector<1x128xf32>
    %9 = vector.broadcast %8 : vector<1x128xf32> to vector<8x128xf32>
    %10 = arith.addf %7, %9 : vector<8x128xf32>
    %cst_9 = arith.constant 0.000000e+00 : f32
    %11 = vector.broadcast %cst_9 : f32 to vector<8x128xf32>
    %12 = arith.maximumf %10, %11 : vector<8x128xf32>
    %13 = arith.truncf %12 : vector<8x128xf32> to vector<8x128xbf16>
    %cst_10 = arith.constant dense<0.000000e+00> : vector<8x128xf32>
    %14 = tpu.matmul %13, %4, %cst_10 {dimension_numbers = #tpu.dot_dimension_numbers<[1], [0], [0], [1], [0, 0, 1, 1], [], []>} : vector<8x128xbf16>, vector<128x128xbf16>, vector<8x128xf32> -> vector<8x128xf32>
    %15 = vector.extract_strided_slice %0 {offsets = [1, 0], sizes = [1, 128], strides = [1, 1]} : vector<8x128xf32> to vector<1x128xf32>
    %16 = vector.broadcast %15 : vector<1x128xf32> to vector<8x128xf32>
    %17 = arith.addf %14, %16 : vector<8x128xf32>
    %cst_11 = arith.constant 0.000000e+00 : f32
    %18 = vector.broadcast %cst_11 : f32 to vector<8x128xf32>
    %19 = arith.maximumf %17, %18 : vector<8x128xf32>
    %20 = arith.truncf %19 : vector<8x128xf32> to vector<8x128xbf16>
    %cst_12 = arith.constant dense<0.000000e+00> : vector<8x128xf32>
    %21 = tpu.matmul %20, %5, %cst_12 {dimension_numbers = #tpu.dot_dimension_numbers<[1], [0], [0], [1], [0, 0, 1, 1], [], []>} : vector<8x128xbf16>, vector<128x128xbf16>, vector<8x128xf32> -> vector<8x128xf32>
    %22 = vector.extract_strided_slice %0 {offsets = [2, 0], sizes = [1, 128], strides = [1, 1]} : vector<8x128xf32> to vector<1x128xf32>
    %23 = vector.broadcast %22 : vector<1x128xf32> to vector<8x128xf32>
    %24 = arith.addf %21, %23 : vector<8x128xf32>
    %cst_13 = arith.constant 0.000000e+00 : f32
    %25 = vector.broadcast %cst_13 : f32 to vector<8x128xf32>
    %26 = arith.maximumf %24, %25 : vector<8x128xf32>
    %27 = arith.truncf %26 : vector<8x128xf32> to vector<8x128xbf16>
    %cst_14 = arith.constant dense<0.000000e+00> : vector<8x128xf32>
    %28 = tpu.matmul %27, %6, %cst_14 {dimension_numbers = #tpu.dot_dimension_numbers<[1], [0], [0], [1], [0, 0, 1, 1], [], []>} : vector<8x128xbf16>, vector<128x128xbf16>, vector<8x128xf32> -> vector<8x128xf32>
    %29 = vector.extract_strided_slice %0 {offsets = [3, 0], sizes = [1, 128], strides = [1, 1]} : vector<8x128xf32> to vector<1x128xf32>
    %30 = vector.broadcast %29 : vector<1x128xf32> to vector<8x128xf32>
    %31 = arith.addf %28, %30 : vector<8x128xf32>
    %32 = tpu.iota {dimensions = array<i32: 1>} : vector<8x128xi32>
    %c5_i32 = arith.constant 5 : i32
    %33 = vector.broadcast %c5_i32 : i32 to vector<8x128xi32>
    %34 = arith.cmpi sge, %32, %33 : vector<8x128xi32>
    %c18_i32 = arith.constant 18 : i32
    %35 = vector.broadcast %c18_i32 : i32 to vector<8x128xi32>
    %36 = arith.cmpi slt, %32, %35 : vector<8x128xi32>
    %37 = arith.andi %34, %36 : vector<8x128xi1>
    %cst_15 = arith.constant -1.000000e+30 : f32
    %38 = vector.broadcast %cst_15 : f32 to vector<8x128xf32>
    %39 = arith.select %37, %31, %38 : vector<8x128xi1>, vector<8x128xf32>
    %cst_16 = arith.constant dense<0xFF800000> : vector<8xf32>
    %40 = vector.multi_reduction <maximumf>, %39, %cst_16 [1] : vector<8x128xf32> to vector<8xf32>
    %41 = vector.shape_cast %40 : vector<8xf32> to vector<8x1xf32>
    %42 = vector.broadcast %41 : vector<8x1xf32> to vector<8x128xf32>
    %43 = arith.subf %39, %42 : vector<8x128xf32>
    %44 = math.exp %43 : vector<8x128xf32>
    %cst_17 = arith.constant dense<0.000000e+00> : vector<8xf32>
    %45 = vector.multi_reduction <add>, %44, %cst_17 [1] : vector<8x128xf32> to vector<8xf32>
    %46 = vector.shape_cast %45 : vector<8xf32> to vector<8x1xf32>
    %47 = vector.broadcast %46 : vector<8x1xf32> to vector<8x128xf32>
    %48 = arith.divf %44, %47 : vector<8x128xf32>
    %cst_18 = arith.constant 5.000000e-01 : f32
    %49 = vector.broadcast %cst_18 : f32 to vector<8x128xf32>
    %50 = arith.mulf %49, %31 : vector<8x128xf32>
    %51 = math.tanh %50 : vector<8x128xf32>
    %cst_19 = arith.constant 1.000000e+00 : f32
    %52 = vector.broadcast %cst_19 : f32 to vector<8x128xf32>
    %53 = arith.addf %51, %52 : vector<8x128xf32>
    %cst_20 = arith.constant 5.000000e-01 : f32
    %54 = vector.broadcast %cst_20 : f32 to vector<8x128xf32>
    %55 = arith.mulf %54, %53 : vector<8x128xf32>
    %c5_i32_21 = arith.constant 5 : i32
    %56 = vector.broadcast %c5_i32_21 : i32 to vector<8x128xi32>
    %57 = arith.cmpi slt, %32, %56 : vector<8x128xi32>
    %58 = arith.select %57, %55, %48 : vector<8x128xi1>, vector<8x128xf32>
    %c0_22 = arith.constant 0 : index
    %c0_23 = arith.constant 0 : index
    %59 = vector.load %arg5[%c0_22, %c0_23] : memref<8x128xf32, #tpu.memory_space<vmem>>, vector<8x128xf32>
    tpu.vector_store %arg5[%c0_22, %c0_23], %58 {strides = array<i32>} : memref<8x128xf32, #tpu.memory_space<vmem>>, vector<8x128xf32>,
    return
  }
  func.func @transform_0(%arg0: i32) -> (i32, i32) {
    %c0_i32 = arith.constant 0 : i32
    %c0_i32_0 = arith.constant 0 : i32
    return %arg0, %c0_i32 : i32, i32
  }
  func.func @transform_1(%arg0: i32) -> (i32, i32) {
    %c0_i32 = arith.constant 0 : i32
    %c0_i32_0 = arith.constant 0 : i32
    %c0_i32_1 = arith.constant 0 : i32
    return %c0_i32, %c0_i32_0 : i32, i32
  }
  func.func @transform_2(%arg0: i32) -> (i32, i32) {
    %c0_i32 = arith.constant 0 : i32
    %c0_i32_0 = arith.constant 0 : i32
    %c0_i32_1 = arith.constant 0 : i32
    return %c0_i32, %c0_i32_0 : i32, i32
  }
  func.func @transform_3(%arg0: i32) -> (i32, i32) {
    %c0_i32 = arith.constant 0 : i32
    %c0_i32_0 = arith.constant 0 : i32
    %c0_i32_1 = arith.constant 0 : i32
    return %c0_i32, %c0_i32_0 : i32, i32
  }
  func.func @transform_4(%arg0: i32) -> (i32, i32) {
    %c0_i32 = arith.constant 0 : i32
    %c0_i32_0 = arith.constant 0 : i32
    return %arg0, %c0_i32 : i32, i32
  }
}

</mosaic_0001>

<llo_original>
// kernel: dice_network_forward.1
$region0: #{dice_network_forward.1}
  #allocation0 [shape = 'u32[]', space=smem, size = 0x4, offset = 0x4, fixed_abs, tag = 'smem constant byte address 0x4 - core index']
  #allocation1 [shape = 'u32[144,128]{1,0:T(1,128)}', space=vmem, size = 0x12000, scoped, tag = 'internal scratch']
  %s0 = inlined_call_operand.hbm [shape: f32[16,44], index: 0, kind: input, shape index: {}]
  %s1 = inlined_call_operand.hbm [shape: bf16[44,128], index: 1, kind: input, shape index: {}]
  %s2 = inlined_call_operand.hbm [shape: bf16[384,128], index: 2, kind: input, shape index: {}]
  %s3 = inlined_call_operand.vmem [shape: f32[8,128], index: 3, kind: input, shape index: {}]
  %s4 = inlined_call_operand.vmem [shape: f32[16,128], index: 4, kind: output, shape index: {}]
  %s5 = sld [smem:[#allocation0]]
  $region61: #{dice_network_forward.1} parent=0
    _
  %s7 = ssub.s32 1, %s5
  %s8 = scalar_select 0, %s7, %s5
  $region1: #{dice_network_forward.1} parent=0
    #allocation2 [shape = 'u8[8192]{0}', space=vmem, size = 0x2000, scoped, tag = 'input window, operand 0']
    #allocation3 [shape = 's32[2]{0}', space=sflag, size = 0x8, scoped, tag = 'scoped memory for dice_network_forward.1']
    #allocation4 [shape = 'u8[12288]{0}', space=vmem, size = 0x3000, scoped, tag = 'input window, operand 1, single buffered']
    #allocation5 [shape = 's32[1]{0}', space=sflag, size = 0x4, scoped, tag = 'scoped memory for dice_network_forward.1']
    #allocation6 [shape = 'u8[98304]{0}', space=vmem, size = 0x18000, scoped, tag = 'input window, operand 2, single buffered']
    %9 = vsyncpa [#allocation3], 0
    %s10 = scalar_lea.sflag [#allocation3], 1
    %11 = vsyncpa %s10, 0
    %12 = vsyncpa [#allocation5], 0
    loop: start=0, step=1, limit=4
    $region2: #{dice_network_forward.1} parent=1 // loop_pre_header
      _
    $region3: #{dice_network_forward.1} parent=1 // loop_header
      %s14 = sphi 0, %s18
      %p15 = scmp.ge.s32.totalorder %s14, 4
      %s24 = sphi 0, %s26
      %s27 = sphi 0, %s24
      %s28 = sphi 0, %s27
      %s44 = sphi 0, %s28
      %s48 = sphi 0, %s48
      %s50 = sphi 0, %s48
      %s51 = sphi 0, %s50
      %s65 = sphi 0, %s51
      %s69 = sphi 0, %s69
      %s71 = sphi 0, %s69
      %s72 = sphi 0, %s71
      %s86 = sphi 0, %s72
      %s90 = sphi 0, %s90
      %s92 = sphi 0, %s90
      %s93 = sphi 0, %s92
      %s107 = sphi 0, %s93
      %s113 = sphi 0, %s115
      %s116 = sphi 0, %s113
      %s117 = sphi 0, %s116
      %s133 = sphi 0, %s117
    $region4: #{dice_network_forward.1} parent=1 // loop_header_branch
      %17 = sbr.rel (%p15) target = $region8
    $region5: #{dice_network_forward.1} parent=1 // loop_body
      %s19 = ssub.s32 %s14, 1
      %s20 = ssub.s32 %s14, 2
      %s21 = sadd.s32 %s14, 1
      %s22 = ssub.s32 %s14, %s21
      %p23 = scmp.eq.s32.totalorder %s22, 0
      %s25 = sadd.s32 %s24, 1
      %s26 = scalar_select %p23, %s24, %s25
      %p29 = pneg %p23
      %p30 = scmp.eq.s32.totalorder %s14, 1
      %p31 = por %p29, %p30
      %p32 = scmp.ne.s32.totalorder %s24, %s27
      %p33 = scmp.eq.s32.totalorder %s14, 0
      %p34 = por %p32, %p33
      %p35 = scmp.ne.s32.totalorder %s24, %s27
      %p36 = scmp.eq.s32.totalorder %s19, 1
      %p37 = por %p35, %p36
      %p38 = scmp.ne.s32.totalorder %s27, %s28
      %p39 = scmp.eq.s32.totalorder %s19, 0
      %p40 = por %p38, %p39
      %p41 = scmp.ne.s32.totalorder %s27, %s28
      %p42 = scmp.eq.s32.totalorder %s20, 1
      %p43 = por %p41, %p42
      %p45 = scmp.ne.s32.totalorder %s28, %s44
      %p46 = scmp.eq.s32.totalorder %s20, 0
      %p47 = por %p45, %p46
      %s49 = sadd.s32 %s48, 1
      %p52 = scmp.eq.s32.totalorder %s14, 1
      %p53 = scmp.ne.s32.totalorder %s48, %s50
      %p54 = scmp.eq.s32.totalorder %s14, 0
      %p55 = por %p53, %p54
      %p56 = scmp.ne.s32.totalorder %s48, %s50
      %p57 = scmp.eq.s32.totalorder %s19, 1
      %p58 = por %p56, %p57
      %p59 = scmp.ne.s32.totalorder %s50, %s51
      %p60 = scmp.eq.s32.totalorder %s19, 0
      %p61 = por %p59, %p60
      %p62 = scmp.ne.s32.totalorder %s50, %s51
      %p63 = scmp.eq.s32.totalorder %s20, 1
      %p64 = por %p62, %p63
      %p66 = scmp.ne.s32.totalorder %s51, %s65
      %p67 = scmp.eq.s32.totalorder %s20, 0
      %p68 = por %p66, %p67
      %s70 = sadd.s32 %s69, 1
      %p73 = scmp.eq.s32.totalorder %s14, 1
      %p74 = scmp.ne.s32.totalorder %s69, %s71
      %p75 = scmp.eq.s32.totalorder %s14, 0
      %p76 = por %p74, %p75
      %p77 = scmp.ne.s32.totalorder %s69, %s71
      %p78 = scmp.eq.s32.totalorder %s19, 1
      %p79 = por %p77, %p78
      %p80 = scmp.ne.s32.totalorder %s71, %s72
      %p81 = scmp.eq.s32.totalorder %s19, 0
      %p82 = por %p80, %p81
      %p83 = scmp.ne.s32.totalorder %s71, %s72
      %p84 = scmp.eq.s32.totalorder %s20, 1
      %p85 = por %p83, %p84
      %p87 = scmp.ne.s32.totalorder %s72, %s86
      %p88 = scmp.eq.s32.totalorder %s20, 0
      %p89 = por %p87, %p88
      %s91 = sadd.s32 %s90, 1
      %p94 = scmp.eq.s32.totalorder %s14, 1
      %p95 = scmp.ne.s32.totalorder %s90, %s92
      %p96 = scmp.eq.s32.totalorder %s14, 0
      %p97 = por %p95, %p96
      %p98 = scmp.ne.s32.totalorder %s90, %s92
      %p99 = scmp.eq.s32.totalorder %s19, 1
      %p100 = por %p98, %p99
      %p101 = scmp.ne.s32.totalorder %s92, %s93
      %p102 = scmp.eq.s32.totalorder %s19, 0
      %p103 = por %p101, %p102
      %p104 = scmp.ne.s32.totalorder %s92, %s93
      %p105 = scmp.eq.s32.totalorder %s20, 1
      %p106 = por %p104, %p105
      %p108 = scmp.ne.s32.totalorder %s93, %s107
      %p109 = scmp.eq.s32.totalorder %s20, 0
      %p110 = por %p108, %p109
      %s111 = ssub.s32 %s14, %s21
      %p112 = scmp.eq.s32.totalorder %s111, 0
      %s114 = sadd.s32 %s113, 1
      %s115 = scalar_select %p112, %s113, %s114
      %p118 = pneg %p112
      %p119 = scmp.eq.s32.totalorder %s14, 1
      %p120 = por %p118, %p119
      %p121 = scmp.ne.s32.totalorder %s113, %s116
      %p122 = scmp.eq.s32.totalorder %s14, 0
      %p123 = por %p121, %p122
      %p124 = scmp.ne.s32.totalorder %s113, %s116
      %p125 = scmp.eq.s32.totalorder %s19, 1
      %p126 = por %p124, %p125
      %p127 = scmp.ne.s32.totalorder %s116, %s117
      %p128 = scmp.eq.s32.totalorder %s19, 0
      %p129 = por %p127, %p128
      %p130 = scmp.ne.s32.totalorder %s116, %s117
      %p131 = scmp.eq.s32.totalorder %s20, 1
      %p132 = por %p130, %p131
      %p134 = scmp.ne.s32.totalorder %s117, %s133
      %p135 = scmp.eq.s32.totalorder %s20, 0
      %p136 = por %p134, %p135
      %p137 = scmp.le.s32.totalorder 1, %s14
      %p138 = scmp.lt.s32.totalorder %s14, 3
      %p139 = pnand %p137, %p138
      %p140 = pneg %p139
      // Predicated region
      $region9: #{dice_network_forward.1} parent=5 // pred_check
        _
      $region10: #{dice_network_forward.1} parent=5 // pred_check_branch
        %142 = sbr.rel (%p139) target = $region12
      $region11: #{dice_network_forward.1} parent=5 // pred_region
        %s143 = ssub.s32 %s14, 1
        // Predicated region
        $region13: #{dice_network_forward.1} parent=11 // pred_check
          %p144 = pneg %p61
        $region14: #{dice_network_forward.1} parent=11 // pred_check_branch
          %146 = sbr.rel (%p144) target = $region16
        $region15: #{dice_network_forward.1} parent=11 // pred_region
          %s148 = ssub.s32 384, 384
          %149 = vsyncadd [#allocation5], %s148
          %s150 = sshll.u32 [#allocation4], 4
          %s151 = int_to_ptr.vmem [resolvable:$true] %s150
          %156 = dma.hbm_to_vmem [thread:$0]  %s1, 384, %s151, [#allocation5], 64, 64, 4
        $region16: #{dice_network_forward.1} parent=11 // pred_fallthru
          _
        // Predicated region
        $region17: #{dice_network_forward.1} parent=11 // pred_check
          %p157 = pneg %p82
        $region18: #{dice_network_forward.1} parent=11 // pred_check_branch
          %159 = sbr.rel (%p157) target = $region20
        $region19: #{dice_network_forward.1} parent=11 // pred_region
          %s161 = ssub.s32 3072, 3072
          %162 = vsyncadd [#allocation5], %s161
          %s163 = sshll.u32 [#allocation6], 4
          %s164 = int_to_ptr.vmem [resolvable:$true] %s163
          %169 = dma.hbm_to_vmem [thread:$0]  %s2, 3072, %s164, [#allocation5], 64, 64, 4
        $region20: #{dice_network_forward.1} parent=11 // pred_fallthru
          _
        // Predicated region
        $region21: #{dice_network_forward.1} parent=11 // pred_check
          %p170 = pneg %p103
        $region22: #{dice_network_forward.1} parent=11 // pred_check_branch
          %172 = sbr.rel (%p170) target = $region24
        $region23: #{dice_network_forward.1} parent=11 // pred_region
          _
        $region24: #{dice_network_forward.1} parent=11 // pred_fallthru
          _
      $region12: #{dice_network_forward.1} parent=5 // pred_fallthru
        _
      %p173 = scmp.lt.s32.totalorder %s14, 2
      // Predicated region
      $region25: #{dice_network_forward.1} parent=5 // pred_check
        %p174 = pneg %p173
      $region26: #{dice_network_forward.1} parent=5 // pred_check_branch
        %176 = sbr.rel (%p174) target = $region28
      $region27: #{dice_network_forward.1} parent=5 // pred_region
        // Predicated region
        $region29: #{dice_network_forward.1} parent=27 // pred_check
          %p177 = pneg %p34
        $region30: #{dice_network_forward.1} parent=27 // pred_check_branch
          %179 = sbr.rel (%p177) target = $region32
        $region31: #{dice_network_forward.1} parent=27 // pred_region
          %s180 = sand.u32 %s24, 1
          %s181 = scalar_lea.sflag [#allocation3], %s180
          %s182 = sand.u32 %s24, 1
          %s183 = smul.addr %s182, 8
          %s184 = scalar_lea.vmem [#allocation2], %s183
          %s186 = ssub.s32 128, 128
          %187 = vsyncadd %s181, %s186
          %s188 = smul.addr %s14, 128
          %s189 = scalar_lea.hbm %s0, %s188
          %s191 = sshll.u32 %s184, 4
          %s192 = int_to_ptr.vmem [resolvable:$true] %s191
          %194 = dma.hbm_to_vmem [thread:$0]  %s189, 128, %s192, %s181
        $region32: #{dice_network_forward.1} parent=27 // pred_fallthru
          _
      $region28: #{dice_network_forward.1} parent=5 // pred_fallthru
        _
      %p195 = scmp.le.s32.totalorder 1, %s14
      %p196 = scmp.lt.s32.totalorder %s14, 3
      %p197 = pnand %p195, %p196
      %p198 = pneg %p197
      // Predicated region
      $region33: #{dice_network_forward.1} parent=5 // pred_check
        _
      $region34: #{dice_network_forward.1} parent=5 // pred_check_branch
        %200 = sbr.rel (%p197) target = $region36
      $region35: #{dice_network_forward.1} parent=5 // pred_region
        %s201 = ssub.s32 %s14, 1
        %s202 = sand.u32 %s27, 1
        %s203 = scalar_lea.sflag [#allocation3], %s202
        %s204 = sand.u32 %s27, 1
        %s205 = smul.addr %s204, 8
        %s206 = scalar_lea.vmem [#allocation2], %s205
        // Predicated region
        $region37: #{dice_network_forward.1} parent=35 // pred_check
          %p207 = pneg %p40
        $region38: #{dice_network_forward.1} parent=35 // pred_check_branch
          %209 = sbr.rel (%p207) target = $region40
        $region39: #{dice_network_forward.1} parent=35 // pred_region
          %210 = dma.done %s203, 128
        $region40: #{dice_network_forward.1} parent=35 // pred_fallthru
          _
        // Predicated region
        $region41: #{dice_network_forward.1} parent=35 // pred_check
          %p211 = pneg %p61
        $region42: #{dice_network_forward.1} parent=35 // pred_check_branch
          %213 = sbr.rel (%p211) target = $region44
        $region43: #{dice_network_forward.1} parent=35 // pred_region
          %214 = dma.done [#allocation5], 384
        $region44: #{dice_network_forward.1} parent=35 // pred_fallthru
          _
        // Predicated region
        $region45: #{dice_network_forward.1} parent=35 // pred_check
          %p215 = pneg %p82
        $region46: #{dice_network_forward.1} parent=35 // pred_check_branch
          %217 = sbr.rel (%p215) target = $region48
        $region47: #{dice_network_forward.1} parent=35 // pred_region
          %218 = dma.done [#allocation5], 3072
        $region48: #{dice_network_forward.1} parent=35 // pred_fallthru
          _
        %s219 = sand.u32 %s27, 1
        %s220 = scalar_lea.sflag [#allocation3], %s219
        %s221 = sand.u32 %s27, 1
        %s222 = smul.addr %s221, 8
        %s223 = scalar_lea.vmem [#allocation2], %s222
        %p224 = pneg %p40
        %p225 = pneg %p37
        %p226 = pneg %p61
        %p227 = pneg %p58
        %p228 = pneg %p82
        %p229 = pneg %p79
        %p230 = pneg %p103
        %p231 = pneg %p100
        %p232 = pneg %p129
        %p233 = pneg %p126
        %p234 = scmp.lt.s32.totalorder %s19, 1
        %s235 = scalar_select %p234, %s19, 1
        %s236 = smul.addr %s235, 8
        %s237 = scalar_lea.vmem %s4, %s236
        %p238 = scmp.lt.s32.totalorder %s19, 1
        %s239 = scalar_select %p238, %s19, 1
        %s240 = smul.addr %s239, 8
        %s241 = scalar_lea.vmem %s4, %s240
        %v243 = vld [vmem:[%s3] sm:$0xff]
        %v244 = vld [vmem:[%s206] sm:$0xff]
        %v245 = vpack.c.bf16 %v244, %v244
        %v246 = vld [vmem:[#allocation4] sm:$0xf]
        %v247 = vld [vmem:[#allocation4 + $0x4] sm:$0xf]
        %v248 = vld [vmem:[#allocation4 + $0x8] sm:$0xf]
        %v249 = vld [vmem:[#allocation4 + $0xc] sm:$0xf]
        %v250 = vld [vmem:[#allocation4 + $0x10] sm:$0xf]
        %v251 = vld [vmem:[#allocation4 + $0x14] sm:$0x3]
        %v252 = vld [vmem:[#allocation6] sm:$0xf]
        %v253 = vld [vmem:[#allocation6 + $0x4] sm:$0xf]
        %v254 = vld [vmem:[#allocation6 + $0x8] sm:$0xf]
        %v255 = vld [vmem:[#allocation6 + $0xc] sm:$0xf]
        %v256 = vld [vmem:[#allocation6 + $0x10] sm:$0xf]
        %v257 = vld [vmem:[#allocation6 + $0x14] sm:$0xf]
        %v258 = vld [vmem:[#allocation6 + $0x18] sm:$0xf]
        %v259 = vld [vmem:[#allocation6 + $0x1c] sm:$0xf]
        %v260 = vld [vmem:[#allocation6 + $0x20] sm:$0xf]
        %v261 = vld [vmem:[#allocation6 + $0x24] sm:$0xf]
        %v262 = vld [vmem:[#allocation6 + $0x28] sm:$0xf]
        %v263 = vld [vmem:[#allocation6 + $0x2c] sm:$0xf]
        %v264 = vld [vmem:[#allocation6 + $0x30] sm:$0xf]
        %v265 = vld [vmem:[#allocation6 + $0x34] sm:$0xf]
        %v266 = vld [vmem:[#allocation6 + $0x38] sm:$0xf]
        %v267 = vld [vmem:[#allocation6 + $0x3c] sm:$0xf]
        %v268 = vld [vmem:[#allocation6 + $0x40] sm:$0xf]
        %v269 = vld [vmem:[#allocation6 + $0x44] sm:$0xf]
        %v270 = vld [vmem:[#allocation6 + $0x48] sm:$0xf]
        %v271 = vld [vmem:[#allocation6 + $0x4c] sm:$0xf]
        %v272 = vld [vmem:[#allocation6 + $0x50] sm:$0xf]
        %v273 = vld [vmem:[#allocation6 + $0x54] sm:$0xf]
        %v274 = vld [vmem:[#allocation6 + $0x58] sm:$0xf]
        %v275 = vld [vmem:[#allocation6 + $0x5c] sm:$0xf]
        %v276 = vld [vmem:[#allocation6 + $0x60] sm:$0xf]
        %v277 = vld [vmem:[#allocation6 + $0x64] sm:$0xf]
        %v278 = vld [vmem:[#allocation6 + $0x68] sm:$0xf]
        %v279 = vld [vmem:[#allocation6 + $0x6c] sm:$0xf]
        %v280 = vld [vmem:[#allocation6 + $0x70] sm:$0xf]
        %v281 = vld [vmem:[#allocation6 + $0x74] sm:$0xf]
        %v282 = vld [vmem:[#allocation6 + $0x78] sm:$0xf]
        %v283 = vld [vmem:[#allocation6 + $0x7c] sm:$0xf]
        %v284 = vld [vmem:[#allocation6 + $0x80] sm:$0xf]
        %v285 = vld [vmem:[#allocation6 + $0x84] sm:$0xf]
        %v286 = vld [vmem:[#allocation6 + $0x88] sm:$0xf]
        %v287 = vld [vmem:[#allocation6 + $0x8c] sm:$0xf]
        %v288 = vld [vmem:[#allocation6 + $0x90] sm:$0xf]
        %v289 = vld [vmem:[#allocation6 + $0x94] sm:$0xf]
        %v290 = vld [vmem:[#allocation6 + $0x98] sm:$0xf]
        %v291 = vld [vmem:[#allocation6 + $0x9c] sm:$0xf]
        %v292 = vld [vmem:[#allocation6 + $0xa0] sm:$0xf]
        %v293 = vld [vmem:[#allocation6 + $0xa4] sm:$0xf]
        %v294 = vld [vmem:[#allocation6 + $0xa8] sm:$0xf]
        %v295 = vld [vmem:[#allocation6 + $0xac] sm:$0xf]
        %v296 = vld [vmem:[#allocation6 + $0xb0] sm:$0xf]
        %v297 = vld [vmem:[#allocation6 + $0xb4] sm:$0xf]
        %v298 = vld [vmem:[#allocation6 + $0xb8] sm:$0xf]
        %v299 = vld [vmem:[#allocation6 + $0xbc] sm:$0xf]
        %v300 = vlaneseq
        %v301 = vshrl.u32 %v300, 7
        %v302 = vsub.s32 0, %v301
        %v303 = vrot.slane %v243, %v302
        %v310 = vunpack.c.l.b16 %v246
        %v311 = vunpack.c.l.b16 %v247
        %v312 = vunpack.c.l.b16 %v248
        %v313 = vunpack.c.l.b16 %v249
        %v314 = vunpack.c.l.b16 %v250
        %v315 = vunpack.c.l.b16 %v251
        %v316 = vpack.c.b16 %v311, %v310
        %v317 = vpack.c.b16 %v313, %v312
        %v318 = vpack.c.b16 %v315, %v314
        %vm321 = vcmask 359424
        %v323 = vsel %vm321, %v245, 0
        %vm325 = vcmask 1045504
        %v327 = vsel %vm325, %v318, 0
        %329 = vmatprep.subr.bf16.mxu0 0
        %330 = vmatpush1.bf16.msra.mxu0 %v316
        %331 = vmatprep.subr.bf16.mxu0 0
        %332 = vmatpush1.bf16.msra.mxu0 %v317
        %333 = vmatprep.subr.bf16.mxu0 0
        %334 = vmatpush1.bf16.msra.mxu0 %v327
        %335 = vmatprep.subr.bf16.mxu0 0
        %336 = vmatpush1.bf16.msra.mxu0 0
        %337 = vmatprep.subr.bf16.mxu0 0
        %338 = vmatpush1.bf16.msra.mxu0 0
        %339 = vmatprep.subr.bf16.mxu0 0
        %340 = vmatpush1.bf16.msra.mxu0 0
        %341 = vmatprep.subr.bf16.mxu0 0
        %342 = vmatpush1.bf16.msra.mxu0 0
        %343 = vmatprep.subr.bf16.mxu0 0
        %344 = vmatpush1.bf16.msra.mxu0 0
        %345 = vmatprep.subr.bf16.mxu0 0
        %346 = vmatpush1.bf16.msra.mxu0 0
        %347 = vmatprep.subr.bf16.mxu0 0
        %348 = vmatpush1.bf16.msra.mxu0 0
        %349 = vmatprep.subr.bf16.mxu0 0
        %350 = vmatpush1.bf16.msra.mxu0 0
        %351 = vmatprep.subr.bf16.mxu0 0
        %352 = vmatpush1.bf16.msra.mxu0 0
        %353 = vmatprep.subr.bf16.mxu0 0
        %354 = vmatpush1.bf16.msra.mxu0 0
        %355 = vmatprep.subr.bf16.mxu0 0
        %356 = vmatpush1.bf16.msra.mxu0 0
        %357 = vmatprep.subr.bf16.mxu0 0
        %358 = vmatpush1.bf16.msra.mxu0 0
        %359 = vmatprep.subr.bf16.mxu0 0
        %360 = vmatpush1.bf16.msra.mxu0 0
        %361 = vmatprep.mubr.bf16.mxu0 0
        %362 = vmatmul.mubr.bf16.gmra.mrb[0].mxu0 %v323
        %v363 = vpop.f32.mrb[0].mxu0
        %v364 = vadd.f32 %v303, %v363
        %v365 = vpop.f32.mrb[0].mxu0
        %v366 = vpop.f32.mrb[0].mxu0
        %v367 = vpop.f32.mrb[0].mxu0
        %368 = vdwg.mxu0
        %v369 = vmax.f32 %v364, 0.0
        %v370 = vpack.c.bf16 %v369, %v369
        %v371 = vlaneseq
        %v372 = vshrl.u32 %v371, 7
        %v373 = vsub.s32 1, %v372
        %v374 = vrot.slane %v243, %v373
        %v391 = vunpack.c.l.b16 %v252
        %v392 = vunpack.c.l.b16 %v253
        %v393 = vunpack.c.l.b16 %v254
        %v394 = vunpack.c.l.b16 %v255
        %v395 = vunpack.c.l.b16 %v256
        %v396 = vunpack.c.l.b16 %v257
        %v397 = vunpack.c.l.b16 %v258
        %v398 = vunpack.c.l.b16 %v259
        %v399 = vunpack.c.l.b16 %v260
        %v400 = vunpack.c.l.b16 %v261
        %v401 = vunpack.c.l.b16 %v262
        %v402 = vunpack.c.l.b16 %v263
        %v403 = vunpack.c.l.b16 %v264
        %v404 = vunpack.c.l.b16 %v265
        %v405 = vunpack.c.l.b16 %v266
        %v406 = vunpack.c.l.b16 %v267
        %v407 = vpack.c.b16 %v392, %v391
        %v408 = vpack.c.b16 %v394, %v393
        %v409 = vpack.c.b16 %v396, %v395
        %v410 = vpack.c.b16 %v398, %v397
        %v411 = vpack.c.b16 %v400, %v399
        %v412 = vpack.c.b16 %v402, %v401
        %v413 = vpack.c.b16 %v404, %v403
        %v414 = vpack.c.b16 %v406, %v405
        %423 = vmatprep.subr.bf16.mxu0 0
        %424 = vmatpush1.bf16.msra.mxu0 %v407
        %425 = vmatprep.subr.bf16.mxu0 0
        %426 = vmatpush1.bf16.msra.mxu0 %v408
        %427 = vmatprep.subr.bf16.mxu0 0
        %428 = vmatpush1.bf16.msra.mxu0 %v409
        %429 = vmatprep.subr.bf16.mxu0 0
        %430 = vmatpush1.bf16.msra.mxu0 %v410
        %431 = vmatprep.subr.bf16.mxu0 0
        %432 = vmatpush1.bf16.msra.mxu0 %v411
        %433 = vmatprep.subr.bf16.mxu0 0
        %434 = vmatpush1.bf16.msra.mxu0 %v412
        %435 = vmatprep.subr.bf16.mxu0 0
        %436 = vmatpush1.bf16.msra.mxu0 %v413
        %437 = vmatprep.subr.bf16.mxu0 0
        %438 = vmatpush1.bf16.msra.mxu0 %v414
        %439 = vmatprep.subr.bf16.mxu0 0
        %440 = vmatpush1.bf16.msra.mxu0 0
        %441 = vmatprep.subr.bf16.mxu0 0
        %442 = vmatpush1.bf16.msra.mxu0 0
        %443 = vmatprep.subr.bf16.mxu0 0
        %444 = vmatpush1.bf16.msra.mxu0 0
        %445 = vmatprep.subr.bf16.mxu0 0
        %446 = vmatpush1.bf16.msra.mxu0 0
        %447 = vmatprep.subr.bf16.mxu0 0
        %448 = vmatpush1.bf16.msra.mxu0 0
        %449 = vmatprep.subr.bf16.mxu0 0
        %450 = vmatpush1.bf16.msra.mxu0 0
        %451 = vmatprep.subr.bf16.mxu0 0
        %452 = vmatpush1.bf16.msra.mxu0 0
        %453 = vmatprep.subr.bf16.mxu0 0
        %454 = vmatpush1.bf16.msra.mxu0 0
        %455 = vmatprep.mubr.bf16.mxu0 0
        %456 = vmatmul.mubr.bf16.gmra.mrb[0].mxu0 %v370
        %v457 = vpop.f32.mrb[0].mxu0
        %v458 = vadd.f32 %v374, %v457
        %v459 = vpop.f32.mrb[0].mxu0
        %v460 = vpop.f32.mrb[0].mxu0
        %v461 = vpop.f32.mrb[0].mxu0
        %462 = vdwg.mxu0
        %v463 = vmax.f32 %v458, 0.0
        %v464 = vpack.c.bf16 %v463, %v463
        %v465 = vlaneseq
        %v466 = vshrl.u32 %v465, 7
        %v467 = vsub.s32 2, %v466
        %v468 = vrot.slane %v243, %v467
        %v485 = vunpack.c.l.b16 %v268
        %v486 = vunpack.c.l.b16 %v269
        %v487 = vunpack.c.l.b16 %v270
        %v488 = vunpack.c.l.b16 %v271
        %v489 = vunpack.c.l.b16 %v272
        %v490 = vunpack.c.l.b16 %v273
        %v491 = vunpack.c.l.b16 %v274
        %v492 = vunpack.c.l.b16 %v275
        %v493 = vunpack.c.l.b16 %v276
        %v494 = vunpack.c.l.b16 %v277
        %v495 = vunpack.c.l.b16 %v278
        %v496 = vunpack.c.l.b16 %v279
        %v497 = vunpack.c.l.b16 %v280
        %v498 = vunpack.c.l.b16 %v281
        %v499 = vunpack.c.l.b16 %v282
        %v500 = vunpack.c.l.b16 %v283
        %v501 = vpack.c.b16 %v486, %v485
        %v502 = vpack.c.b16 %v488, %v487
        %v503 = vpack.c.b16 %v490, %v489
        %v504 = vpack.c.b16 %v492, %v491
        %v505 = vpack.c.b16 %v494, %v493
        %v506 = vpack.c.b16 %v496, %v495
        %v507 = vpack.c.b16 %v498, %v497
        %v508 = vpack.c.b16 %v500, %v499
        %517 = vmatprep.subr.bf16.mxu0 0
        %518 = vmatpush1.bf16.msra.mxu0 %v501
        %519 = vmatprep.subr.bf16.mxu0 0
        %520 = vmatpush1.bf16.msra.mxu0 %v502
        %521 = vmatprep.subr.bf16.mxu0 0
        %522 = vmatpush1.bf16.msra.mxu0 %v503
        %523 = vmatprep.subr.bf16.mxu0 0
        %524 = vmatpush1.bf16.msra.mxu0 %v504
        %525 = vmatprep.subr.bf16.mxu0 0
        %526 = vmatpush1.bf16.msra.mxu0 %v505
        %527 = vmatprep.subr.bf16.mxu0 0
        %528 = vmatpush1.bf16.msra.mxu0 %v506
        %529 = vmatprep.subr.bf16.mxu0 0
        %530 = vmatpush1.bf16.msra.mxu0 %v507
        %531 = vmatprep.subr.bf16.mxu0 0
        %532 = vmatpush1.bf16.msra.mxu0 %v508
        %533 = vmatprep.subr.bf16.mxu0 0
        %534 = vmatpush1.bf16.msra.mxu0 0
        %535 = vmatprep.subr.bf16.mxu0 0
        %536 = vmatpush1.bf16.msra.mxu0 0
        %537 = vmatprep.subr.bf16.mxu0 0
        %538 = vmatpush1.bf16.msra.mxu0 0
        %539 = vmatprep.subr.bf16.mxu0 0
        %540 = vmatpush1.bf16.msra.mxu0 0
        %541 = vmatprep.subr.bf16.mxu0 0
        %542 = vmatpush1.bf16.msra.mxu0 0
        %543 = vmatprep.subr.bf16.mxu0 0
        %544 = vmatpush1.bf16.msra.mxu0 0
        %545 = vmatprep.subr.bf16.mxu0 0
        %546 = vmatpush1.bf16.msra.mxu0 0
        %547 = vmatprep.subr.bf16.mxu0 0
        %548 = vmatpush1.bf16.msra.mxu0 0
        %549 = vmatprep.mubr.bf16.mxu0 0
        %550 = vmatmul.mubr.bf16.gmra.mrb[0].mxu0 %v464
        %v551 = vpop.f32.mrb[0].mxu0
        %v552 = vadd.f32 %v468, %v551
        %v553 = vpop.f32.mrb[0].mxu0
        %v554 = vpop.f32.mrb[0].mxu0
        %v555 = vpop.f32.mrb[0].mxu0
        %556 = vdwg.mxu0
        %v557 = vmax.f32 %v552, 0.0
        %v558 = vpack.c.bf16 %v557, %v557
        %v559 = vlaneseq
        %v560 = vshrl.u32 %v559, 7
        %v561 = vsub.s32 3, %v560
        %v562 = vrot.slane %v243, %v561
        %v579 = vunpack.c.l.b16 %v284
        %v580 = vunpack.c.l.b16 %v285
        %v581 = vunpack.c.l.b16 %v286
        %v582 = vunpack.c.l.b16 %v287
        %v583 = vunpack.c.l.b16 %v288
        %v584 = vunpack.c.l.b16 %v289
        %v585 = vunpack.c.l.b16 %v290
        %v586 = vunpack.c.l.b16 %v291
        %v587 = vunpack.c.l.b16 %v292
        %v588 = vunpack.c.l.b16 %v293
        %v589 = vunpack.c.l.b16 %v294
        %v590 = vunpack.c.l.b16 %v295
        %v591 = vunpack.c.l.b16 %v296
        %v592 = vunpack.c.l.b16 %v297
        %v593 = vunpack.c.l.b16 %v298
        %v594 = vunpack.c.l.b16 %v299
        %v595 = vpack.c.b16 %v580, %v579
        %v596 = vpack.c.b16 %v582, %v581
        %v597 = vpack.c.b16 %v584, %v583
        %v598 = vpack.c.b16 %v586, %v585
        %v599 = vpack.c.b16 %v588, %v587
        %v600 = vpack.c.b16 %v590, %v589
        %v601 = vpack.c.b16 %v592, %v591
        %v602 = vpack.c.b16 %v594, %v593
        %611 = vmatprep.subr.bf16.mxu0 0
        %612 = vmatpush1.bf16.msra.mxu0 %v595
        %613 = vmatprep.subr.bf16.mxu0 0
        %614 = vmatpush1.bf16.msra.mxu0 %v596
        %615 = vmatprep.subr.bf16.mxu0 0
        %616 = vmatpush1.bf16.msra.mxu0 %v597
        %617 = vmatprep.subr.bf16.mxu0 0
        %618 = vmatpush1.bf16.msra.mxu0 %v598
        %619 = vmatprep.subr.bf16.mxu0 0
        %620 = vmatpush1.bf16.msra.mxu0 %v599
        %621 = vmatprep.subr.bf16.mxu0 0
        %622 = vmatpush1.bf16.msra.mxu0 %v600
        %623 = vmatprep.subr.bf16.mxu0 0
        %624 = vmatpush1.bf16.msra.mxu0 %v601
        %625 = vmatprep.subr.bf16.mxu0 0
        %626 = vmatpush1.bf16.msra.mxu0 %v602
        %627 = vmatprep.subr.bf16.mxu0 0
        %628 = vmatpush1.bf16.msra.mxu0 0
        %629 = vmatprep.subr.bf16.mxu0 0
        %630 = vmatpush1.bf16.msra.mxu0 0
        %631 = vmatprep.subr.bf16.mxu0 0
        %632 = vmatpush1.bf16.msra.mxu0 0
        %633 = vmatprep.subr.bf16.mxu0 0
        %634 = vmatpush1.bf16.msra.mxu0 0
        %635 = vmatprep.subr.bf16.mxu0 0
        %636 = vmatpush1.bf16.msra.mxu0 0
        %637 = vmatprep.subr.bf16.mxu0 0
        %638 = vmatpush1.bf16.msra.mxu0 0
        %639 = vmatprep.subr.bf16.mxu0 0
        %640 = vmatpush1.bf16.msra.mxu0 0
        %641 = vmatprep.subr.bf16.mxu0 0
        %642 = vmatpush1.bf16.msra.mxu0 0
        %643 = vmatprep.mubr.bf16.mxu0 0
        %644 = vmatmul.mubr.bf16.gmra.mrb[0].mxu0 %v558
        %v645 = vpop.f32.mrb[0].mxu0
        %v646 = vadd.f32 %v562, %v645
        %v647 = vpop.f32.mrb[0].mxu0
        %v648 = vpop.f32.mrb[0].mxu0
        %v649 = vpop.f32.mrb[0].mxu0
        %650 = vdwg.mxu0
        %v651 = vlaneseq
        %v652 = vand.u32 %v651, 127
        %vm653 = vcmp.ge.s32.totalorder %v652, 5
        %vm654 = vcmp.lt.s32.totalorder %v652, 18
        %vm655 = vmand %vm653, %vm654
        %v656 = vsel %vm655, %v646, -1e+30
        %657 = vmax.xlane.f32.xlu0 %v656
        %v658 = vpop.xlane.xlu0 %657
        %v659 = vsub.f32 %v656, %v658
        %v660 = vmul.f32 %v659, 1.442695
        %v661 = vpow.pop %v660
        %662 = vadd.xlane.f32.xlu0 %v661
        %v663 = vpop.xlane.xlu0 %662
        %v664 = vrcp.pop %v663
        %v665 = vmul.f32 %v661, %v664
        %v666 = vmul.f32 %v646, 0.5
        %v667 = vtanh.pop %v666
        %v668 = vadd.f32 %v667, 1.0
        %v669 = vmul.f32 %v668, 0.5
        %vm670 = vcmp.lt.s32.totalorder %v652, 5
        %v671 = vsel %vm670, %v669, %v665
        %672 = vst [vmem:[%s241] sm:$0xff] %v671
        %p673 = scmp.lt.s32.totalorder %s19, 1
        %s674 = scalar_select %p673, %s19, 1
        %s675 = smul.addr %s674, 8
        %s676 = scalar_lea.vmem %s4, %s675
        // Predicated region
        $region49: #{dice_network_forward.1} parent=35 // pred_check
          %p677 = pneg %p126
        $region50: #{dice_network_forward.1} parent=35 // pred_check_branch
          %679 = sbr.rel (%p677) target = $region52
        $region51: #{dice_network_forward.1} parent=35 // pred_region
          _
        $region52: #{dice_network_forward.1} parent=35 // pred_fallthru
          _
      $region36: #{dice_network_forward.1} parent=5 // pred_fallthru
        _
      %p680 = scmp.le.s32.totalorder 2, %s14
      // Predicated region
      $region53: #{dice_network_forward.1} parent=5 // pred_check
        %p681 = pneg %p680
      $region54: #{dice_network_forward.1} parent=5 // pred_check_branch
        %683 = sbr.rel (%p681) target = $region56
      $region55: #{dice_network_forward.1} parent=5 // pred_region
        %s684 = ssub.s32 %s14, 2
        // Predicated region
        $region57: #{dice_network_forward.1} parent=55 // pred_check
          %p685 = pneg %p132
        $region58: #{dice_network_forward.1} parent=55 // pred_check_branch
          %687 = sbr.rel (%p685) target = $region60
        $region59: #{dice_network_forward.1} parent=55 // pred_region
          %p688 = scmp.lt.s32.totalorder %s20, 1
          %s689 = scalar_select %p688, %s20, 1
          %s690 = smul.addr %s689, 8
          %s691 = scalar_lea.vmem %s4, %s690
        $region60: #{dice_network_forward.1} parent=55 // pred_fallthru
          _
      $region56: #{dice_network_forward.1} parent=5 // pred_fallthru
        _
    $region6: #{dice_network_forward.1} parent=1 // loop_footer
      %s18 = sadd.s32 1, %s14
    $region7: #{dice_network_forward.1} parent=1 // loop_footer_branch
      %13 = sbr.rel target = $region3
    $region8: #{dice_network_forward.1} parent=1 // loop_exit
      _
    %692 = vsyncpa [#allocation3], 1
    %s693 = scalar_lea.sflag [#allocation3], 1
    %694 = vsyncpa %s693, 1
    %695 = vsyncpa [#allocation5], 1

</llo_original>
